<compile_context>
chip_gen: v7x
topology: tpu7x:2x2x1
jax: 0.10.0
libtpu: 0.0.40
codegen_flags: <defaults>
</compile_context>

<pallas_src>
import jax
import jax.numpy as jnp
from jax.experimental import pallas as pl
from jax.experimental.pallas import tpu as pltpu


def _leaky_relu(v, slope=0.01):
    # one mul + one max (vs cmp+mul+select)
    return jnp.maximum(v, slope * v)


def _round_up(x, m):
    return ((x + m - 1) // m) * m


def _pick_batch_tile(batch, sub_band, itemsize):
    """Batch tile: VMEM-budgeted from sub_band, 128-aligned, >=2 grid steps."""
    half = sub_band // 2
    # per-batch-column working-set bytes: streamed input (double-buffered) +
    # x1/x2 (compute dtype) + h1/h2/h (f32) + MLP activations (f32)
    per_col = (sub_band * itemsize * 2
               + sub_band * (2 * itemsize + 3 * 4)
               + half * 3 * 4)
    budget = 8 * 1024 * 1024
    cap = max(128, (budget // max(per_col, 1)) // 128 * 128)
    cap = min(cap, 1024)
    if batch <= 128:
        # lane block must be a multiple of 128 or the full extent; small batch
        # -> single full-extent block.
        return batch
    # at least 2 grid steps so v7x megacore can split the batch
    return int(min(cap, _round_up((batch + 1) // 2, 128)))


# ---------------------------------------------------------------------------
# Kernel A: batch-on-lanes (features on sublanes, batch on lanes), sub_band<128
# ---------------------------------------------------------------------------
def _cross_pred_kernel_lanes(x_ref, s_ref,
                             w1t_ref, b1_ref, w2t_ref, b2_ref,
                             wm1t_ref, bm1_ref, wm2t_ref, bm2_ref,
                             wm3t_ref, bm3_ref, out_ref):
    cd = x_ref.dtype
    x = x_ref[...].astype(jnp.float32)                     # (S, TB)
    s = s_ref[...].astype(jnp.float32)                     # (nc_band, TB)
    n_clip = x.shape[0] // s.shape[0]
    if n_clip > 1:
        s = jnp.tile(s, (n_clip, 1))                       # expand_as: sublane repeat
    x1 = (s * x).astype(cd)
    x2 = (s - x).astype(cd)
    h1 = _leaky_relu(jnp.dot(w1t_ref[...], x1,
                             preferred_element_type=jnp.float32) + b1_ref[...])
    h2 = _leaky_relu(jnp.dot(w2t_ref[...], x2,
                             preferred_element_type=jnp.float32) + b2_ref[...])
    h = (h1 + h2).astype(cd)
    h = _leaky_relu(jnp.dot(wm1t_ref[...], h,
                            preferred_element_type=jnp.float32) + bm1_ref[...]).astype(cd)
    h = _leaky_relu(jnp.dot(wm2t_ref[...], h,
                            preferred_element_type=jnp.float32) + bm2_ref[...]).astype(cd)
    logits = jnp.dot(wm3t_ref[...], h,
                     preferred_element_type=jnp.float32) + bm3_ref[...]   # (1, TB)
    out_ref[...] = jax.nn.sigmoid(logits)


# ---------------------------------------------------------------------------
# Kernel B: batch-on-sublanes (standard layout), sub_band >= 128, un-fused
# ---------------------------------------------------------------------------
def _cross_pred_kernel_sublanes(x_ref, s_ref,
                                w1_ref, b1_ref, w2_ref, b2_ref,
                                wm1_ref, bm1_ref, wm2_ref, bm2_ref,
                                wm3r_ref, bm3_ref, out_ref):
    cd = x_ref.dtype
    x = x_ref[...].astype(jnp.float32)                     # (TB, S)
    s = s_ref[...].astype(jnp.float32)                     # (TB, nc_band)
    n_clip = x.shape[1] // s.shape[1]
    if n_clip > 1:
        s = jnp.tile(s, (1, n_clip))                       # expand_as: lane repeat
    x1 = (s * x).astype(cd)
    x2 = (s - x).astype(cd)
    h1 = _leaky_relu(jnp.dot(x1, w1_ref[...],
                             preferred_element_type=jnp.float32) + b1_ref[...])
    h2 = _leaky_relu(jnp.dot(x2, w2_ref[...],
                             preferred_element_type=jnp.float32) + b2_ref[...])
    h = (h1 + h2).astype(cd)
    h = _leaky_relu(jnp.dot(h, wm1_ref[...],
                            preferred_element_type=jnp.float32) + bm1_ref[...]).astype(cd)
    h = _leaky_relu(jnp.dot(h, wm2_ref[...],
                            preferred_element_type=jnp.float32) + bm2_ref[...]).astype(cd)
    # final Linear(S/2, 1): contract both operands' last dims -> lane-dense
    # (1, TB) row, no (TB, S/2) transpose materialized.
    logits = jax.lax.dot_general(
        wm3r_ref[...], h, dimension_numbers=(((1,), (1,)), ((), ())),
        preferred_element_type=jnp.float32) + bm3_ref[...]
    out_ref[...] = jax.nn.sigmoid(logits)


def init_params(key, sub_band):
    """Deterministic synthetic parameters (shapes match the PyTorch module)."""
    half = sub_band // 2
    keys = jax.random.split(key, 10)

    def lin(kw, kb, fan_in, fan_out):
        # weights stored (in, out) so the math is x @ W + b
        bound = 1.0 / jnp.sqrt(fan_in)
        w = jax.random.uniform(kw, (fan_in, fan_out), jnp.float32, -bound, bound)
        b = jax.random.uniform(kb, (1, fan_out), jnp.float32, -bound, bound)
        return w, b

    w1, b1 = lin(keys[0], keys[1], sub_band, sub_band)
    w2, b2 = lin(keys[2], keys[3], sub_band, sub_band)
    wm1, bm1 = lin(keys[4], keys[5], sub_band, half)
    wm2, bm2 = lin(keys[6], keys[7], half, half)
    wm3, bm3 = lin(keys[8], keys[9], half, 1)
    return (w1, b1, w2, b2, wm1, bm1, wm2, bm2, wm3, bm3)


def cross_pred_net(sample, x, params, n_clip, sub_band, *,
                   compute_dtype=jnp.bfloat16):
    """sample: (B, 1, nc_band), x: (B, n_clip, nc_band). Returns (B, 1, 1)."""
    B = x.shape[0]
    nc_band = sub_band // n_clip
    half = sub_band // 2
    (w1, b1, w2, b2, wm1, bm1, wm2, bm2, wm3, bm3) = params

    itemsize = jnp.dtype(compute_dtype).itemsize
    tb = _pick_batch_tile(B, sub_band, itemsize)
    grid = (pl.cdiv(B, tb),)
    batch_on_lanes = sub_band < 128

    if batch_on_lanes:
        kernel = _cross_pred_kernel_lanes
        # features on sublanes, batch on lanes -> lane-dense at small sub_band
        x_in = x.reshape(B, sub_band).T.astype(compute_dtype)       # (S, B)
        s_in = sample.reshape(B, nc_band).T.astype(compute_dtype)   # (nc_band, B)
        weights = (
            w1.T.astype(compute_dtype), b1.reshape(sub_band, 1).astype(jnp.float32),
            w2.T.astype(compute_dtype), b2.reshape(sub_band, 1).astype(jnp.float32),
            wm1.T.astype(compute_dtype), bm1.reshape(half, 1).astype(jnp.float32),
            wm2.T.astype(compute_dtype), bm2.reshape(half, 1).astype(jnp.float32),
            wm3.T.astype(compute_dtype), bm3.reshape(1, 1).astype(jnp.float32),
        )
        data_specs = [
            pl.BlockSpec((sub_band, tb), lambda i: (0, i)),   # x tile (streamed)
            pl.BlockSpec((nc_band, tb), lambda i: (0, i)),    # sample tile (streamed)
        ]
    else:
        kernel = _cross_pred_kernel_sublanes
        x_in = x.reshape(B, sub_band).astype(compute_dtype)         # (B, S)
        s_in = sample.reshape(B, nc_band).astype(compute_dtype)     # (B, nc_band)
        weights = (
            w1.astype(compute_dtype), b1.astype(jnp.float32),
            w2.astype(compute_dtype), b2.astype(jnp.float32),
            wm1.astype(compute_dtype), bm1.astype(jnp.float32),
            wm2.astype(compute_dtype), bm2.astype(jnp.float32),
            wm3.T.astype(compute_dtype), bm3.reshape(1, 1).astype(jnp.float32),
        )
        data_specs = [
            pl.BlockSpec((tb, sub_band), lambda i: (i, 0)),
            pl.BlockSpec((tb, nc_band), lambda i: (i, 0)),
        ]

    # weights: whole-array blocks with constant index -> VMEM-resident
    weight_specs = [pl.BlockSpec(w.shape, lambda i: (0, 0)) for w in weights]

    # explicit VMEM budget (v7x has 64 MiB physical / 32 MiB default scoped)
    weight_bytes = sum(int(w.size) * w.dtype.itemsize for w in weights)
    stream_bytes = tb * (sub_band + nc_band) * itemsize * 2 + tb * 4 * 2
    act_bytes = tb * (sub_band * (2 * itemsize + 3 * 4) + half * 3 * 4)
    est = 2 * weight_bytes + stream_bytes + act_bytes
    vmem_limit = int(min(64 * 1024 * 1024, max(32 * 1024 * 1024, 2 * est)))

    flops = B * (2 * sub_band * sub_band * 2      # fc1 + fc2
                 + 2 * sub_band * half            # MLP layer 1
                 + 2 * half * half                # MLP layer 2
                 + 2 * half                       # final reduction
                 + 8 * sub_band)                  # elementwise / activations
    bytes_accessed = (B * (sub_band + nc_band) * itemsize + B * 4 + weight_bytes)

    out = pl.pallas_call(
        kernel,
        out_shape=jax.ShapeDtypeStruct((1, B), jnp.float32),
        grid=grid,
        in_specs=data_specs + weight_specs,
        out_specs=pl.BlockSpec((1, tb), lambda i: (0, i)),   # lane-dense output row
        compiler_params=pltpu.CompilerParams(
            dimension_semantics=("parallel",),
            vmem_limit_bytes=vmem_limit),
        cost_estimate=pl.CostEstimate(
            flops=flops, transcendentals=B, bytes_accessed=bytes_accessed),
    )(x_in, s_in, *weights)

    # match PyTorch output shape (B, 1, 1)
    return out.reshape(B, 1, 1)


def reference(sample, x, params, n_clip, sub_band):
    """Plain-JAX reference (un-fused f32 math) for correctness checks."""
    (w1, b1, w2, b2, wm1, bm1, wm2, bm2, wm3, bm3) = params
    B = x.shape[0]
    s = jnp.broadcast_to(sample, x.shape).reshape(B, sub_band)
    xf = x.reshape(B, sub_band)
    h1 = _leaky_relu((s * xf) @ w1 + b1)
    h2 = _leaky_relu((s - xf) @ w2 + b2)
    h = h1 + h2
    h = _leaky_relu(h @ wm1 + bm1)
    h = _leaky_relu(h @ wm2 + bm2)
    return jax.nn.sigmoid(h @ wm3 + bm3).reshape(B, 1, 1)


if __name__ == "__main__":
    key = jax.random.PRNGKey(0)
    k_x, k_s, k_p, k_x2, k_s2, k_x3, k_s3, k_p3 = jax.random.split(key, 8)

    # --- small-S demo (batch-on-lanes path): B=2, n_clip=4, sub_band=32 ---
    B, n_clip, sub_band = 2, 4, 32
    nc_band = sub_band // n_clip  # 8
    x = jax.random.normal(k_x, (B, n_clip, nc_band), jnp.float32)
    sample = jax.random.normal(k_s, (B, 1, nc_band), jnp.float32)
    params = init_params(k_p, sub_band)
    ref = reference(sample, x, params, n_clip, sub_band)

    # exact-parity f32 kernel
    pred = jax.block_until_ready(
        cross_pred_net(sample, x, params, n_clip, sub_band,
                       compute_dtype=jnp.float32))
    assert pred.shape == (B, 1, 1)
    assert jnp.allclose(pred, ref, atol=1e-5, rtol=1e-5), "f32 mismatch vs reference"

    # bf16-streamed performance path (relaxed tolerance vs f32 reference)
    pred_bf = jax.block_until_ready(
        cross_pred_net(sample, x, params, n_clip, sub_band))
    assert jnp.allclose(pred_bf, ref, atol=3e-2, rtol=3e-2), "bf16 mismatch vs reference"

    # --- ragged batch: multi-step grid + masked writeback on the last tile ---
    B2 = 300
    x2 = jax.random.normal(k_x2, (B2, n_clip, nc_band), jnp.float32)
    sample2 = jax.random.normal(k_s2, (B2, 1, nc_band), jnp.float32)
    ref2 = reference(sample2, x2, params, n_clip, sub_band)
    pred2 = jax.block_until_ready(
        cross_pred_net(sample2, x2, params, n_clip, sub_band,
                       compute_dtype=jnp.float32))
    assert jnp.allclose(pred2, ref2, atol=1e-5, rtol=1e-5), "ragged-B mismatch"

    # --- large-S path (batch-on-sublanes, un-fused): sub_band=256, B=64 ---
    B3, n_clip3, sub_band3 = 64, 4, 256
    nc_band3 = sub_band3 // n_clip3
    x3 = jax.random.normal(k_x3, (B3, n_clip3, nc_band3), jnp.float32)
    sample3 = jax.random.normal(k_s3, (B3, 1, nc_band3), jnp.float32)
    params3 = init_params(k_p3, sub_band3)
    ref3 = reference(sample3, x3, params3, n_clip3, sub_band3)
    pred3 = jax.block_until_ready(
        cross_pred_net(sample3, x3, params3, n_clip3, sub_band3,
                       compute_dtype=jnp.float32))
    assert jnp.allclose(pred3, ref3, atol=1e-5, rtol=1e-5), "large-S path mismatch"

    print("KERNEL_OK")
</pallas_src>

<mosaic_0001>
module attributes {stable_mosaic.version = 11 : i64} {
  func.func @_cross_pred_kernel_lanes(%arg0: i32, %arg1: memref<32x2xf32, #tpu.memory_space<vmem>>, %arg2: memref<8x2xf32, #tpu.memory_space<vmem>>, %arg3: memref<32x32xf32, #tpu.memory_space<vmem>>, %arg4: memref<32x1xf32, #tpu.memory_space<vmem>>, %arg5: memref<32x32xf32, #tpu.memory_space<vmem>>, %arg6: memref<32x1xf32, #tpu.memory_space<vmem>>, %arg7: memref<16x32xf32, #tpu.memory_space<vmem>>, %arg8: memref<16x1xf32, #tpu.memory_space<vmem>>, %arg9: memref<16x16xf32, #tpu.memory_space<vmem>>, %arg10: memref<16x1xf32, #tpu.memory_space<vmem>>, %arg11: memref<1x16xf32, #tpu.memory_space<vmem>>, %arg12: memref<1x1xf32, #tpu.memory_space<vmem>>, %arg13: memref<1x2xf32, #tpu.memory_space<vmem>>) attributes {dimension_semantics = [#tpu.dimension_semantics<parallel>], iteration_bounds = array<i64: 1>, scalar_prefetch = 0 : i64, scratch_operands = 0 : i64, tpu.core_type = #tpu.core_type<tc>, window_params = [{transform_indices = @transform_0, window_bounds = array<i64: 32, 2>}, {transform_indices = @transform_1, window_bounds = array<i64: 8, 2>}, {pipeline_mode = #tpu.pipeline_mode<synchronous>, transform_indices = @transform_2, window_bounds = array<i64: 32, 32>}, {pipeline_mode = #tpu.pipeline_mode<synchronous>, transform_indices = @transform_3, window_bounds = array<i64: 32, 1>}, {pipeline_mode = #tpu.pipeline_mode<synchronous>, transform_indices = @transform_4, window_bounds = array<i64: 32, 32>}, {pipeline_mode = #tpu.pipeline_mode<synchronous>, transform_indices = @transform_5, window_bounds = array<i64: 32, 1>}, {pipeline_mode = #tpu.pipeline_mode<synchronous>, transform_indices = @transform_6, window_bounds = array<i64: 16, 32>}, {pipeline_mode = #tpu.pipeline_mode<synchronous>, transform_indices = @transform_7, window_bounds = array<i64: 16, 1>}, {pipeline_mode = #tpu.pipeline_mode<synchronous>, transform_indices = @transform_8, window_bounds = array<i64: 16, 16>}, {pipeline_mode = #tpu.pipeline_mode<synchronous>, transform_indices = @transform_9, window_bounds = array<i64: 16, 1>}, {pipeline_mode = #tpu.pipeline_mode<synchronous>, transform_indices = @transform_10, window_bounds = array<i64: 1, 16>}, {pipeline_mode = #tpu.pipeline_mode<synchronous>, transform_indices = @transform_11, window_bounds = array<i64: 1, 1>}, {transform_indices = @transform_12, window_bounds = array<i64: 1, 2>}]} {
    %c0 = arith.constant 0 : index
    %c0_0 = arith.constant 0 : index
    %0 = vector.load %arg1[%c0, %c0_0] : memref<32x2xf32, #tpu.memory_space<vmem>>, vector<32x2xf32>
    %c0_1 = arith.constant 0 : index
    %c0_2 = arith.constant 0 : index
    %1 = vector.load %arg2[%c0_1, %c0_2] : memref<8x2xf32, #tpu.memory_space<vmem>>, vector<8x2xf32>
    %2 = tpu.concatenate %1, %1, %1, %1 in 0 : vector<8x2xf32>, vector<8x2xf32>, vector<8x2xf32>, vector<8x2xf32> -> vector<32x2xf32>
    %3 = arith.mulf %2, %0 : vector<32x2xf32>
    %4 = arith.subf %2, %0 : vector<32x2xf32>
    %c0_3 = arith.constant 0 : index
    %c0_4 = arith.constant 0 : index
    %5 = vector.load %arg3[%c0_3, %c0_4] : memref<32x32xf32, #tpu.memory_space<vmem>>, vector<32x32xf32>
    %cst = arith.constant dense<0.000000e+00> : vector<32x2xf32>
    %6 = tpu.matmul %5, %3, %cst {dimension_numbers = #tpu.dot_dimension_numbers<[1], [0], [0], [1], [0, 0, 1, 1], [], []>} : vector<32x32xf32>, vector<32x2xf32>, vector<32x2xf32> -> vector<32x2xf32>
    %c0_5 = arith.constant 0 : index
    %c0_6 = arith.constant 0 : index
    %7 = vector.load %arg4[%c0_5, %c0_6] : memref<32x1xf32, #tpu.memory_space<vmem>>, vector<32x1xf32>
    %8 = vector.broadcast %7 : vector<32x1xf32> to vector<32x2xf32>
    %9 = arith.addf %6, %8 : vector<32x2xf32>
    %cst_7 = arith.constant 0.00999999977 : f32
    %10 = vector.broadcast %cst_7 : f32 to vector<32x2xf32>
    %11 = arith.mulf %10, %9 : vector<32x2xf32>
    %12 = arith.maximumf %9, %11 : vector<32x2xf32>
    %c0_8 = arith.constant 0 : index
    %c0_9 = arith.constant 0 : index
    %13 = vector.load %arg5[%c0_8, %c0_9] : memref<32x32xf32, #tpu.memory_space<vmem>>, vector<32x32xf32>
    %cst_10 = arith.constant dense<0.000000e+00> : vector<32x2xf32>
    %14 = tpu.matmul %13, %4, %cst_10 {dimension_numbers = #tpu.dot_dimension_numbers<[1], [0], [0], [1], [0, 0, 1, 1], [], []>} : vector<32x32xf32>, vector<32x2xf32>, vector<32x2xf32> -> vector<32x2xf32>
    %c0_11 = arith.constant 0 : index
    %c0_12 = arith.constant 0 : index
    %15 = vector.load %arg6[%c0_11, %c0_12] : memref<32x1xf32, #tpu.memory_space<vmem>>, vector<32x1xf32>
    %16 = vector.broadcast %15 : vector<32x1xf32> to vector<32x2xf32>
    %17 = arith.addf %14, %16 : vector<32x2xf32>
    %cst_13 = arith.constant 0.00999999977 : f32
    %18 = vector.broadcast %cst_13 : f32 to vector<32x2xf32>
    %19 = arith.mulf %18, %17 : vector<32x2xf32>
    %20 = arith.maximumf %17, %19 : vector<32x2xf32>
    %21 = arith.addf %12, %20 : vector<32x2xf32>
    %c0_14 = arith.constant 0 : index
    %c0_15 = arith.constant 0 : index
    %22 = vector.load %arg7[%c0_14, %c0_15] : memref<16x32xf32, #tpu.memory_space<vmem>>, vector<16x32xf32>
    %cst_16 = arith.constant dense<0.000000e+00> : vector<16x2xf32>
    %23 = tpu.matmul %22, %21, %cst_16 {dimension_numbers = #tpu.dot_dimension_numbers<[1], [0], [0], [1], [0, 0, 1, 1], [], []>} : vector<16x32xf32>, vector<32x2xf32>, vector<16x2xf32> -> vector<16x2xf32>
    %c0_17 = arith.constant 0 : index
    %c0_18 = arith.constant 0 : index
    %24 = vector.load %arg8[%c0_17, %c0_18] : memref<16x1xf32, #tpu.memory_space<vmem>>, vector<16x1xf32>
    %25 = vector.broadcast %24 : vector<16x1xf32> to vector<16x2xf32>
    %26 = arith.addf %23, %25 : vector<16x2xf32>
    %cst_19 = arith.constant 0.00999999977 : f32
    %27 = vector.broadcast %cst_19 : f32 to vector<16x2xf32>
    %28 = arith.mulf %27, %26 : vector<16x2xf32>
    %29 = arith.maximumf %26, %28 : vector<16x2xf32>
    %c0_20 = arith.constant 0 : index
    %c0_21 = arith.constant 0 : index
    %30 = vector.load %arg9[%c0_20, %c0_21] : memref<16x16xf32, #tpu.memory_space<vmem>>, vector<16x16xf32>
    %cst_22 = arith.constant dense<0.000000e+00> : vector<16x2xf32>
    %31 = tpu.matmul %30, %29, %cst_22 {dimension_numbers = #tpu.dot_dimension_numbers<[1], [0], [0], [1], [0, 0, 1, 1], [], []>} : vector<16x16xf32>, vector<16x2xf32>, vector<16x2xf32> -> vector<16x2xf32>
    %c0_23 = arith.constant 0 : index
    %c0_24 = arith.constant 0 : index
    %32 = vector.load %arg10[%c0_23, %c0_24] : memref<16x1xf32, #tpu.memory_space<vmem>>, vector<16x1xf32>
    %33 = vector.broadcast %32 : vector<16x1xf32> to vector<16x2xf32>
    %34 = arith.addf %31, %33 : vector<16x2xf32>
    %cst_25 = arith.constant 0.00999999977 : f32
    %35 = vector.broadcast %cst_25 : f32 to vector<16x2xf32>
    %36 = arith.mulf %35, %34 : vector<16x2xf32>
    %37 = arith.maximumf %34, %36 : vector<16x2xf32>
    %c0_26 = arith.constant 0 : index
    %c0_27 = arith.constant 0 : index
    %38 = vector.load %arg11[%c0_26, %c0_27] : memref<1x16xf32, #tpu.memory_space<vmem>>, vector<1x16xf32>
    %cst_28 = arith.constant dense<0.000000e+00> : vector<1x2xf32>
    %39 = tpu.matmul %38, %37, %cst_28 {dimension_numbers = #tpu.dot_dimension_numbers<[1], [0], [0], [1], [0, 0, 1, 1], [], []>} : vector<1x16xf32>, vector<16x2xf32>, vector<1x2xf32> -> vector<1x2xf32>
    %c0_29 = arith.constant 0 : index
    %c0_30 = arith.constant 0 : index
    %40 = vector.load %arg12[%c0_29, %c0_30] : memref<1x1xf32, #tpu.memory_space<vmem>>, vector<1x1xf32>
    %41 = vector.broadcast %40 : vector<1x1xf32> to vector<1x2xf32>
    %42 = arith.addf %39, %41 : vector<1x2xf32>
    %43 = arith.negf %42 : vector<1x2xf32>
    %44 = math.exp %43 : vector<1x2xf32>
    %cst_31 = arith.constant 1.000000e+00 : f32
    %45 = vector.broadcast %cst_31 : f32 to vector<1x2xf32>
    %46 = arith.addf %45, %44 : vector<1x2xf32>
    %47 = arith.divf %45, %46 : vector<1x2xf32>
    %c0_32 = arith.constant 0 : index
    %c0_33 = arith.constant 0 : index
    %48 = vector.load %arg13[%c0_32, %c0_33] : memref<1x2xf32, #tpu.memory_space<vmem>>, vector<1x2xf32>
    tpu.vector_store %arg13[%c0_32, %c0_33], %47 {strides = array<i32>} : memref<1x2xf32, #tpu.memory_space<vmem>>, vector<1x2xf32>,
    return
  }
  func.func @transform_0(%arg0: i32) -> (i32, i32) {
    %c0_i32 = arith.constant 0 : i32
    %c0_i32_0 = arith.constant 0 : i32
    return %c0_i32, %arg0 : i32, i32
  }
  func.func @transform_1(%arg0: i32) -> (i32, i32) {
    %c0_i32 = arith.constant 0 : i32
    %c0_i32_0 = arith.constant 0 : i32
    return %c0_i32, %arg0 : i32, i32
  }
  func.func @transform_2(%arg0: i32) -> (i32, i32) {
    %c0_i32 = arith.constant 0 : i32
    %c0_i32_0 = arith.constant 0 : i32
    %c0_i32_1 = arith.constant 0 : i32
    return %c0_i32, %c0_i32_0 : i32, i32
  }
  func.func @transform_3(%arg0: i32) -> (i32, i32) {
    %c0_i32 = arith.constant 0 : i32
    %c0_i32_0 = arith.constant 0 : i32
    %c0_i32_1 = arith.constant 0 : i32
    return %c0_i32, %c0_i32_0 : i32, i32
  }
  func.func @transform_4(%arg0: i32) -> (i32, i32) {
    %c0_i32 = arith.constant 0 : i32
    %c0_i32_0 = arith.constant 0 : i32
    %c0_i32_1 = arith.constant 0 : i32
    return %c0_i32, %c0_i32_0 : i32, i32
  }
  func.func @transform_5(%arg0: i32) -> (i32, i32) {
    %c0_i32 = arith.constant 0 : i32
    %c0_i32_0 = arith.constant 0 : i32
    %c0_i32_1 = arith.constant 0 : i32
    return %c0_i32, %c0_i32_0 : i32, i32
  }
  func.func @transform_6(%arg0: i32) -> (i32, i32) {
    %c0_i32 = arith.constant 0 : i32
    %c0_i32_0 = arith.constant 0 : i32
    %c0_i32_1 = arith.constant 0 : i32
    return %c0_i32, %c0_i32_0 : i32, i32
  }
  func.func @transform_7(%arg0: i32) -> (i32, i32) {
    %c0_i32 = arith.constant 0 : i32
    %c0_i32_0 = arith.constant 0 : i32
    %c0_i32_1 = arith.constant 0 : i32
    return %c0_i32, %c0_i32_0 : i32, i32
  }
  func.func @transform_8(%arg0: i32) -> (i32, i32) {
    %c0_i32 = arith.constant 0 : i32
    %c0_i32_0 = arith.constant 0 : i32
    %c0_i32_1 = arith.constant 0 : i32
    return %c0_i32, %c0_i32_0 : i32, i32
  }
  func.func @transform_9(%arg0: i32) -> (i32, i32) {
    %c0_i32 = arith.constant 0 : i32
    %c0_i32_0 = arith.constant 0 : i32
    %c0_i32_1 = arith.constant 0 : i32
    return %c0_i32, %c0_i32_0 : i32, i32
  }
  func.func @transform_10(%arg0: i32) -> (i32, i32) {
    %c0_i32 = arith.constant 0 : i32
    %c0_i32_0 = arith.constant 0 : i32
    %c0_i32_1 = arith.constant 0 : i32
    return %c0_i32, %c0_i32_0 : i32, i32
  }
  func.func @transform_11(%arg0: i32) -> (i32, i32) {
    %c0_i32 = arith.constant 0 : i32
    %c0_i32_0 = arith.constant 0 : i32
    %c0_i32_1 = arith.constant 0 : i32
    return %c0_i32, %c0_i32_0 : i32, i32
  }
  func.func @transform_12(%arg0: i32) -> (i32, i32) {
    %c0_i32 = arith.constant 0 : i32
    %c0_i32_0 = arith.constant 0 : i32
    return %c0_i32, %arg0 : i32, i32
  }
}

</mosaic_0001>

<llo_original>
// kernel: tpu_custom_call.1
$region0: #{tpu_custom_call.1}
  #allocation0 [shape = 'u32[]', space=smem, size = 0x4, offset = 0x4, fixed_abs, tag = 'smem constant byte address 0x4 - core index']
  #allocation1 [shape = 'u32[144,128]{1,0:T(1,128)}', space=vmem, size = 0x12000, scoped, tag = 'internal scratch']
  #allocation2 [shape = 'f32[1,1]{1,0:T(1,128)S(1)}', space=vmem, size = 0x200, scoped, tag = 'scoped memory for tpu_custom_call.1']
  %s0 = inlined_call_operand.vmem [shape: f32[32,2], index: 0, kind: input, shape index: {}]
  %s1 = inlined_call_operand.vmem [shape: f32[8,2], index: 1, kind: input, shape index: {}]
  %s2 = inlined_call_operand.vmem [shape: f32[32,32], index: 2, kind: input, shape index: {}]
  %s3 = inlined_call_operand.vmem [shape: f32[32,1], index: 3, kind: input, shape index: {}]
  %s4 = inlined_call_operand.vmem [shape: f32[32,32], index: 4, kind: input, shape index: {}]
  %s5 = inlined_call_operand.vmem [shape: f32[32,1], index: 5, kind: input, shape index: {}]
  %s6 = inlined_call_operand.vmem [shape: f32[16,32], index: 6, kind: input, shape index: {}]
  %s7 = inlined_call_operand.vmem [shape: f32[16,1], index: 7, kind: input, shape index: {}]
  %s8 = inlined_call_operand.vmem [shape: f32[16,16], index: 8, kind: input, shape index: {}]
  %s9 = inlined_call_operand.vmem [shape: f32[16,1], index: 9, kind: input, shape index: {}]
  %s10 = inlined_call_operand.vmem [shape: f32[1,16], index: 10, kind: input, shape index: {}]
  %s11 = inlined_call_operand.<no memory space> [shape: f32[1,1], index: 11, kind: input, shape index: {}]
  %s12 = inlined_call_operand.hbm [shape: f32[1,2], index: 12, kind: output, shape index: {}]
  %s13 = sld [smem:[#allocation0]]
  $region58: #{tpu_custom_call.1} parent=0
    _
  %s15 = ssub.s32 1, %s13
  %s16 = scalar_select 0, %s15, %s13
  %v17 = vstv %s11
  %18 = vst [vmem:[#allocation2] sm:$0x1] %v17
  $region1: #{tpu_custom_call.1} parent=0
    #allocation3 [shape = 'u8[512]{0}', space=vmem, size = 0x400, scoped, tag = 'output window, operand 0, single buffered']
    #allocation4 [shape = 's32[1]{0}', space=sflag, size = 0x4, scoped, tag = 'scoped memory for tpu_custom_call.1']
    %19 = vsyncpa [#allocation4], 0
    // Predicated region
    $region2: #{tpu_custom_call.1} parent=1 // pred_check
      _
    $region3: #{tpu_custom_call.1} parent=1 // pred_check_branch
      %21 = sbr.rel (0) target = $region5
    $region4: #{tpu_custom_call.1} parent=1 // pred_region
      _
    $region5: #{tpu_custom_call.1} parent=1 // pred_fallthru
      _
    // Predicated region
    $region6: #{tpu_custom_call.1} parent=1 // pred_check
      _
    $region7: #{tpu_custom_call.1} parent=1 // pred_check_branch
      %23 = sbr.rel (0) target = $region9
    $region8: #{tpu_custom_call.1} parent=1 // pred_region
      _
    $region9: #{tpu_custom_call.1} parent=1 // pred_fallthru
      _
    // Predicated region
    $region10: #{tpu_custom_call.1} parent=1 // pred_check
      _
    $region11: #{tpu_custom_call.1} parent=1 // pred_check_branch
      %25 = sbr.rel (0) target = $region13
    $region12: #{tpu_custom_call.1} parent=1 // pred_region
      _
    $region13: #{tpu_custom_call.1} parent=1 // pred_fallthru
      _
    // Predicated region
    $region14: #{tpu_custom_call.1} parent=1 // pred_check
      _
    $region15: #{tpu_custom_call.1} parent=1 // pred_check_branch
      %27 = sbr.rel (0) target = $region17
    $region16: #{tpu_custom_call.1} parent=1 // pred_region
      _
    $region17: #{tpu_custom_call.1} parent=1 // pred_fallthru
      _
    // Predicated region
    $region18: #{tpu_custom_call.1} parent=1 // pred_check
      _
    $region19: #{tpu_custom_call.1} parent=1 // pred_check_branch
      %29 = sbr.rel (0) target = $region21
    $region20: #{tpu_custom_call.1} parent=1 // pred_region
      _
    $region21: #{tpu_custom_call.1} parent=1 // pred_fallthru
      _
    // Predicated region
    $region22: #{tpu_custom_call.1} parent=1 // pred_check
      _
    $region23: #{tpu_custom_call.1} parent=1 // pred_check_branch
      %31 = sbr.rel (0) target = $region25
    $region24: #{tpu_custom_call.1} parent=1 // pred_region
      _
    $region25: #{tpu_custom_call.1} parent=1 // pred_fallthru
      _
    // Predicated region
    $region26: #{tpu_custom_call.1} parent=1 // pred_check
      _
    $region27: #{tpu_custom_call.1} parent=1 // pred_check_branch
      %33 = sbr.rel (0) target = $region29
    $region28: #{tpu_custom_call.1} parent=1 // pred_region
      _
    $region29: #{tpu_custom_call.1} parent=1 // pred_fallthru
      _
    // Predicated region
    $region30: #{tpu_custom_call.1} parent=1 // pred_check
      _
    $region31: #{tpu_custom_call.1} parent=1 // pred_check_branch
      %35 = sbr.rel (0) target = $region33
    $region32: #{tpu_custom_call.1} parent=1 // pred_region
      _
    $region33: #{tpu_custom_call.1} parent=1 // pred_fallthru
      _
    // Predicated region
    $region34: #{tpu_custom_call.1} parent=1 // pred_check
      _
    $region35: #{tpu_custom_call.1} parent=1 // pred_check_branch
      %37 = sbr.rel (0) target = $region37
    $region36: #{tpu_custom_call.1} parent=1 // pred_region
      _
    $region37: #{tpu_custom_call.1} parent=1 // pred_fallthru
      _
    // Predicated region
    $region38: #{tpu_custom_call.1} parent=1 // pred_check
      _
    $region39: #{tpu_custom_call.1} parent=1 // pred_check_branch
      %39 = sbr.rel (0) target = $region41
    $region40: #{tpu_custom_call.1} parent=1 // pred_region
      _
    $region41: #{tpu_custom_call.1} parent=1 // pred_fallthru
      _
    // Predicated region
    $region42: #{tpu_custom_call.1} parent=1 // pred_check
      _
    $region43: #{tpu_custom_call.1} parent=1 // pred_check_branch
      %41 = sbr.rel (0) target = $region45
    $region44: #{tpu_custom_call.1} parent=1 // pred_region
      _
    $region45: #{tpu_custom_call.1} parent=1 // pred_fallthru
      _
    // Predicated region
    $region46: #{tpu_custom_call.1} parent=1 // pred_check
      _
    $region47: #{tpu_custom_call.1} parent=1 // pred_check_branch
      %43 = sbr.rel (0) target = $region49
    $region48: #{tpu_custom_call.1} parent=1 // pred_region
      _
    $region49: #{tpu_custom_call.1} parent=1 // pred_fallthru
      _
    %v44 = vld [vmem:[%s0] sm:$0xff]
    %v45 = vld [vmem:[%s0 + $0x8] sm:$0xff]
    %v46 = vld [vmem:[%s0 + $0x10] sm:$0xff]
    %v47 = vld [vmem:[%s0 + $0x18] sm:$0xff]
    %v48 = vld [vmem:[%s1] sm:$0xff]
    %v49 = vmul.f32 %v48, %v44
    %v50 = vmul.f32 %v48, %v45
    %v51 = vmul.f32 %v48, %v46
    %v52 = vmul.f32 %v48, %v47
    %v53 = vsub.f32 %v48, %v44
    %v54 = vsub.f32 %v48, %v45
    %v55 = vsub.f32 %v48, %v46
    %v56 = vsub.f32 %v48, %v47
    %v57 = vld [vmem:[%s2] sm:$0xff]
    %v58 = vld [vmem:[%s2 + $0x8] sm:$0xff]
    %v59 = vld [vmem:[%s2 + $0x10] sm:$0xff]
    %v60 = vld [vmem:[%s2 + $0x18] sm:$0xff]
    %v61 = vld [vmem:[%s3] sm:$0xff]
    %v62 = vld [vmem:[%s3 + $0x8] sm:$0xff]
    %v63 = vld [vmem:[%s3 + $0x10] sm:$0xff]
    %v64 = vld [vmem:[%s3 + $0x18] sm:$0xff]
    %66 = vset.pattern.permute.xlu0 0
    %67 = vperm.xlu0 %66, %v61
    %v68 = vpop.permute.xlu0 %67
    %71 = vset.pattern.permute.xlu0 0
    %72 = vperm.xlu0 %71, %v62
    %v73 = vpop.permute.xlu0 %72
    %76 = vset.pattern.permute.xlu0 0
    %77 = vperm.xlu0 %76, %v63
    %v78 = vpop.permute.xlu0 %77
    %81 = vset.pattern.permute.xlu0 0
    %82 = vperm.xlu0 %81, %v64
    %v83 = vpop.permute.xlu0 %82
    %vm85 = vcmask 261120
    %v87 = vsel %vm85, %v57, 0
    %v90 = vsel %vm85, %v58, 0
    %v93 = vsel %vm85, %v59, 0
    %v96 = vsel %vm85, %v60, 0
    %98 = vmatprep.subr.mxu0 0.0
    %99 = vmatpush1.msra.mxu0 %v49
    %100 = vmatprep.subr.mxu0 0.0
    %101 = vmatpush1.msra.mxu0 %v50
    %102 = vmatprep.subr.mxu0 0.0
    %103 = vmatpush1.msra.mxu0 %v51
    %104 = vmatprep.subr.mxu0 0.0
    %105 = vmatpush1.msra.mxu0 %v52
    %106 = vmatprep.subr.mxu0 0.0
    %107 = vmatpush1.msra.mxu0 0.0
    %108 = vmatprep.subr.mxu0 0.0
    %109 = vmatpush1.msra.mxu0 0.0
    %110 = vmatprep.subr.mxu0 0.0
    %111 = vmatpush1.msra.mxu0 0.0
    %112 = vmatprep.subr.mxu0 0.0
    %113 = vmatpush1.msra.mxu0 0.0
    %114 = vmatprep.subr.mxu0 0.0
    %115 = vmatpush1.msra.mxu0 0.0
    %116 = vmatprep.subr.mxu0 0.0
    %117 = vmatpush1.msra.mxu0 0.0
    %118 = vmatprep.subr.mxu0 0.0
    %119 = vmatpush1.msra.mxu0 0.0
    %120 = vmatprep.subr.mxu0 0.0
    %121 = vmatpush1.msra.mxu0 0.0
    %122 = vmatprep.subr.mxu0 0.0
    %123 = vmatpush1.msra.mxu0 0.0
    %124 = vmatprep.subr.mxu0 0.0
    %125 = vmatpush1.msra.mxu0 0.0
    %126 = vmatprep.subr.mxu0 0.0
    %127 = vmatpush1.msra.mxu0 0.0
    %128 = vmatprep.subr.mxu0 0.0
    %129 = vmatpush1.msra.mxu0 0.0
    %130 = vmatprep.subr.mxu0 0.0
    %131 = vmatpush1.msra.mxu0 0.0
    %132 = vmatprep.subr.mxu0 0.0
    %133 = vmatpush1.msra.mxu0 0.0
    %134 = vmatprep.subr.mxu0 0.0
    %135 = vmatpush1.msra.mxu0 0.0
    %136 = vmatprep.subr.mxu0 0.0
    %137 = vmatpush1.msra.mxu0 0.0
    %138 = vmatprep.subr.mxu0 0.0
    %139 = vmatpush1.msra.mxu0 0.0
    %140 = vmatprep.subr.mxu0 0.0
    %141 = vmatpush1.msra.mxu0 0.0
    %142 = vmatprep.subr.mxu0 0.0
    %143 = vmatpush1.msra.mxu0 0.0
    %144 = vmatprep.subr.mxu0 0.0
    %145 = vmatpush1.msra.mxu0 0.0
    %146 = vmatprep.subr.mxu0 0.0
    %147 = vmatpush1.msra.mxu0 0.0
    %148 = vmatprep.subr.mxu0 0.0
    %149 = vmatpush1.msra.mxu0 0.0
    %150 = vmatprep.subr.mxu0 0.0
    %151 = vmatpush1.msra.mxu0 0.0
    %152 = vmatprep.subr.mxu0 0.0
    %153 = vmatpush1.msra.mxu0 0.0
    %154 = vmatprep.subr.mxu0 0.0
    %155 = vmatpush1.msra.mxu0 0.0
    %156 = vmatprep.subr.mxu0 0.0
    %157 = vmatpush1.msra.mxu0 0.0
    %158 = vmatprep.subr.mxu0 0.0
    %159 = vmatpush1.msra.mxu0 0.0
    %160 = vmatprep.subr.mxu0 0.0
    %161 = vmatpush1.msra.mxu0 0.0
    %162 = vmatprep.mubr.f32.mxu0 0.0
    %163 = vmatmul.mubr.f32.gmra.mrb[0].mxu0 %v87
    %v164 = vpop.f32.mrb[0].mxu0
    %v165 = vadd.f32 %v68, %v164
    %v166 = vpop.f32.mrb[0].mxu0
    %167 = vmatprep.mubr.f32.mxu0 0.0
    %168 = vmatmul.mubr.f32.gmra.mrb[0].mxu0 %v90
    %v169 = vpop.f32.mrb[0].mxu0
    %v170 = vadd.f32 %v73, %v169
    %v171 = vpop.f32.mrb[0].mxu0
    %172 = vmatprep.mubr.f32.mxu0 0.0
    %173 = vmatmul.mubr.f32.gmra.mrb[0].mxu0 %v93
    %v174 = vpop.f32.mrb[0].mxu0
    %v175 = vadd.f32 %v78, %v174
    %v176 = vpop.f32.mrb[0].mxu0
    %177 = vmatprep.mubr.f32.mxu0 0.0
    %178 = vmatmul.mubr.f32.gmra.mrb[0].mxu0 %v96
    %v179 = vpop.f32.mrb[0].mxu0
    %v180 = vadd.f32 %v83, %v179
    %v181 = vpop.f32.mrb[0].mxu0
    %182 = vdwg.mxu0
    %v183 = vmul.f32 %v165, 0.01
    %v184 = vmul.f32 %v170, 0.01
    %v185 = vmul.f32 %v175, 0.01
    %v186 = vmul.f32 %v180, 0.01
    %v187 = vmax.f32 %v165, %v183
    %v188 = vmax.f32 %v170, %v184
    %v189 = vmax.f32 %v175, %v185
    %v190 = vmax.f32 %v180, %v186
    %v191 = vld [vmem:[%s4] sm:$0xff]
    %v192 = vld [vmem:[%s4 + $0x8] sm:$0xff]
    %v193 = vld [vmem:[%s4 + $0x10] sm:$0xff]
    %v194 = vld [vmem:[%s4 + $0x18] sm:$0xff]
    %v195 = vld [vmem:[%s5] sm:$0xff]
    %v196 = vld [vmem:[%s5 + $0x8] sm:$0xff]
    %v197 = vld [vmem:[%s5 + $0x10] sm:$0xff]
    %v198 = vld [vmem:[%s5 + $0x18] sm:$0xff]
    %200 = vset.pattern.permute.xlu0 0
    %201 = vperm.xlu0 %200, %v195
    %v202 = vpop.permute.xlu0 %201
    %205 = vset.pattern.permute.xlu0 0
    %206 = vperm.xlu0 %205, %v196
    %v207 = vpop.permute.xlu0 %206
    %210 = vset.pattern.permute.xlu0 0
    %211 = vperm.xlu0 %210, %v197
    %v212 = vpop.permute.xlu0 %211
    %215 = vset.pattern.permute.xlu0 0
    %216 = vperm.xlu0 %215, %v198
    %v217 = vpop.permute.xlu0 %216
    %v220 = vsel %vm85, %v191, 0
    %v223 = vsel %vm85, %v192, 0
    %v226 = vsel %vm85, %v193, 0
    %v229 = vsel %vm85, %v194, 0
    %231 = vmatprep.subr.mxu0 0.0
    %232 = vmatpush1.msra.mxu0 %v53
    %233 = vmatprep.subr.mxu0 0.0
    %234 = vmatpush1.msra.mxu0 %v54
    %235 = vmatprep.subr.mxu0 0.0
    %236 = vmatpush1.msra.mxu0 %v55
    %237 = vmatprep.subr.mxu0 0.0
    %238 = vmatpush1.msra.mxu0 %v56
    %239 = vmatprep.subr.mxu0 0.0
    %240 = vmatpush1.msra.mxu0 0.0
    %241 = vmatprep.subr.mxu0 0.0
    %242 = vmatpush1.msra.mxu0 0.0
    %243 = vmatprep.subr.mxu0 0.0
    %244 = vmatpush1.msra.mxu0 0.0
    %245 = vmatprep.subr.mxu0 0.0
    %246 = vmatpush1.msra.mxu0 0.0
    %247 = vmatprep.subr.mxu0 0.0
    %248 = vmatpush1.msra.mxu0 0.0
    %249 = vmatprep.subr.mxu0 0.0
    %250 = vmatpush1.msra.mxu0 0.0
    %251 = vmatprep.subr.mxu0 0.0
    %252 = vmatpush1.msra.mxu0 0.0
    %253 = vmatprep.subr.mxu0 0.0
    %254 = vmatpush1.msra.mxu0 0.0
    %255 = vmatprep.subr.mxu0 0.0
    %256 = vmatpush1.msra.mxu0 0.0
    %257 = vmatprep.subr.mxu0 0.0
    %258 = vmatpush1.msra.mxu0 0.0
    %259 = vmatprep.subr.mxu0 0.0
    %260 = vmatpush1.msra.mxu0 0.0
    %261 = vmatprep.subr.mxu0 0.0
    %262 = vmatpush1.msra.mxu0 0.0
    %263 = vmatprep.subr.mxu0 0.0
    %264 = vmatpush1.msra.mxu0 0.0
    %265 = vmatprep.subr.mxu0 0.0
    %266 = vmatpush1.msra.mxu0 0.0
    %267 = vmatprep.subr.mxu0 0.0
    %268 = vmatpush1.msra.mxu0 0.0
    %269 = vmatprep.subr.mxu0 0.0
    %270 = vmatpush1.msra.mxu0 0.0
    %271 = vmatprep.subr.mxu0 0.0
    %272 = vmatpush1.msra.mxu0 0.0
    %273 = vmatprep.subr.mxu0 0.0
    %274 = vmatpush1.msra.mxu0 0.0
    %275 = vmatprep.subr.mxu0 0.0
    %276 = vmatpush1.msra.mxu0 0.0
    %277 = vmatprep.subr.mxu0 0.0
    %278 = vmatpush1.msra.mxu0 0.0
    %279 = vmatprep.subr.mxu0 0.0
    %280 = vmatpush1.msra.mxu0 0.0
    %281 = vmatprep.subr.mxu0 0.0
    %282 = vmatpush1.msra.mxu0 0.0
    %283 = vmatprep.subr.mxu0 0.0
    %284 = vmatpush1.msra.mxu0 0.0
    %285 = vmatprep.subr.mxu0 0.0
    %286 = vmatpush1.msra.mxu0 0.0
    %287 = vmatprep.subr.mxu0 0.0
    %288 = vmatpush1.msra.mxu0 0.0
    %289 = vmatprep.subr.mxu0 0.0
    %290 = vmatpush1.msra.mxu0 0.0
    %291 = vmatprep.subr.mxu0 0.0
    %292 = vmatpush1.msra.mxu0 0.0
    %293 = vmatprep.subr.mxu0 0.0
    %294 = vmatpush1.msra.mxu0 0.0
    %295 = vmatprep.mubr.f32.mxu0 0.0
    %296 = vmatmul.mubr.f32.gmra.mrb[0].mxu0 %v220
    %v297 = vpop.f32.mrb[0].mxu0
    %v298 = vadd.f32 %v202, %v297
    %v299 = vpop.f32.mrb[0].mxu0
    %300 = vmatprep.mubr.f32.mxu0 0.0
    %301 = vmatmul.mubr.f32.gmra.mrb[0].mxu0 %v223
    %v302 = vpop.f32.mrb[0].mxu0
    %v303 = vadd.f32 %v207, %v302
    %v304 = vpop.f32.mrb[0].mxu0
    %305 = vmatprep.mubr.f32.mxu0 0.0
    %306 = vmatmul.mubr.f32.gmra.mrb[0].mxu0 %v226
    %v307 = vpop.f32.mrb[0].mxu0
    %v308 = vadd.f32 %v212, %v307
    %v309 = vpop.f32.mrb[0].mxu0
    %310 = vmatprep.mubr.f32.mxu0 0.0
    %311 = vmatmul.mubr.f32.gmra.mrb[0].mxu0 %v229
    %v312 = vpop.f32.mrb[0].mxu0
    %v313 = vadd.f32 %v217, %v312
    %v314 = vpop.f32.mrb[0].mxu0
    %315 = vdwg.mxu0
    %v316 = vmul.f32 %v298, 0.01
    %v317 = vmul.f32 %v303, 0.01
    %v318 = vmul.f32 %v308, 0.01
    %v319 = vmul.f32 %v313, 0.01
    %v320 = vmax.f32 %v298, %v316
    %v321 = vmax.f32 %v303, %v317
    %v322 = vmax.f32 %v308, %v318
    %v323 = vmax.f32 %v313, %v319
    %v324 = vadd.f32 %v187, %v320
    %v325 = vadd.f32 %v188, %v321
    %v326 = vadd.f32 %v189, %v322
    %v327 = vadd.f32 %v190, %v323
    %v328 = vld [vmem:[%s6] sm:$0xff]
    %v329 = vld [vmem:[%s6 + $0x8] sm:$0xff]
    %v330 = vld [vmem:[%s7] sm:$0xff]
    %v331 = vld [vmem:[%s7 + $0x8] sm:$0xff]
    %333 = vset.pattern.permute.xlu0 0
    %334 = vperm.xlu0 %333, %v330
    %v335 = vpop.permute.xlu0 %334
    %338 = vset.pattern.permute.xlu0 0
    %339 = vperm.xlu0 %338, %v331
    %v340 = vpop.permute.xlu0 %339
    %v343 = vsel %vm85, %v328, 0
    %v346 = vsel %vm85, %v329, 0
    %348 = vmatprep.subr.mxu0 0.0
    %349 = vmatpush1.msra.mxu0 %v324
    %350 = vmatprep.subr.mxu0 0.0
    %351 = vmatpush1.msra.mxu0 %v325
    %352 = vmatprep.subr.mxu0 0.0
    %353 = vmatpush1.msra.mxu0 %v326
    %354 = vmatprep.subr.mxu0 0.0
    %355 = vmatpush1.msra.mxu0 %v327
    %356 = vmatprep.subr.mxu0 0.0
    %357 = vmatpush1.msra.mxu0 0.0
    %358 = vmatprep.subr.mxu0 0.0
    %359 = vmatpush1.msra.mxu0 0.0
    %360 = vmatprep.subr.mxu0 0.0
    %361 = vmatpush1.msra.mxu0 0.0
    %362 = vmatprep.subr.mxu0 0.0
    %363 = vmatpush1.msra.mxu0 0.0
    %364 = vmatprep.subr.mxu0 0.0
    %365 = vmatpush1.msra.mxu0 0.0
    %366 = vmatprep.subr.mxu0 0.0
    %367 = vmatpush1.msra.mxu0 0.0
    %368 = vmatprep.subr.mxu0 0.0
    %369 = vmatpush1.msra.mxu0 0.0
    %370 = vmatprep.subr.mxu0 0.0
    %371 = vmatpush1.msra.mxu0 0.0
    %372 = vmatprep.subr.mxu0 0.0
    %373 = vmatpush1.msra.mxu0 0.0
    %374 = vmatprep.subr.mxu0 0.0
    %375 = vmatpush1.msra.mxu0 0.0
    %376 = vmatprep.subr.mxu0 0.0
    %377 = vmatpush1.msra.mxu0 0.0
    %378 = vmatprep.subr.mxu0 0.0
    %379 = vmatpush1.msra.mxu0 0.0
    %380 = vmatprep.subr.mxu0 0.0
    %381 = vmatpush1.msra.mxu0 0.0
    %382 = vmatprep.subr.mxu0 0.0
    %383 = vmatpush1.msra.mxu0 0.0
    %384 = vmatprep.subr.mxu0 0.0
    %385 = vmatpush1.msra.mxu0 0.0
    %386 = vmatprep.subr.mxu0 0.0
    %387 = vmatpush1.msra.mxu0 0.0
    %388 = vmatprep.subr.mxu0 0.0
    %389 = vmatpush1.msra.mxu0 0.0
    %390 = vmatprep.subr.mxu0 0.0
    %391 = vmatpush1.msra.mxu0 0.0
    %392 = vmatprep.subr.mxu0 0.0
    %393 = vmatpush1.msra.mxu0 0.0
    %394 = vmatprep.subr.mxu0 0.0
    %395 = vmatpush1.msra.mxu0 0.0
    %396 = vmatprep.subr.mxu0 0.0
    %397 = vmatpush1.msra.mxu0 0.0
    %398 = vmatprep.subr.mxu0 0.0
    %399 = vmatpush1.msra.mxu0 0.0
    %400 = vmatprep.subr.mxu0 0.0
    %401 = vmatpush1.msra.mxu0 0.0
    %402 = vmatprep.subr.mxu0 0.0
    %403 = vmatpush1.msra.mxu0 0.0
    %404 = vmatprep.subr.mxu0 0.0
    %405 = vmatpush1.msra.mxu0 0.0
    %406 = vmatprep.subr.mxu0 0.0
    %407 = vmatpush1.msra.mxu0 0.0
    %408 = vmatprep.subr.mxu0 0.0
    %409 = vmatpush1.msra.mxu0 0.0
    %410 = vmatprep.subr.mxu0 0.0
    %411 = vmatpush1.msra.mxu0 0.0
    %412 = vmatprep.mubr.f32.mxu0 0.0
    %413 = vmatmul.mubr.f32.gmra.mrb[0].mxu0 %v343
    %v414 = vpop.f32.mrb[0].mxu0
    %v415 = vadd.f32 %v335, %v414
    %v416 = vpop.f32.mrb[0].mxu0
    %417 = vmatprep.mubr.f32.mxu0 0.0
    %418 = vmatmul.mubr.f32.gmra.mrb[0].mxu0 %v346
    %v419 = vpop.f32.mrb[0].mxu0
    %v420 = vadd.f32 %v340, %v419
    %v421 = vpop.f32.mrb[0].mxu0
    %422 = vdwg.mxu0
    %v423 = vmul.f32 %v415, 0.01
    %v424 = vmul.f32 %v420, 0.01
    %v425 = vmax.f32 %v415, %v423
    %v426 = vmax.f32 %v420, %v424
    %v427 = vld [vmem:[%s8] sm:$0xff]
    %v428 = vld [vmem:[%s8 + $0x8] sm:$0xff]
    %v429 = vld [vmem:[%s9] sm:$0xff]
    %v430 = vld [vmem:[%s9 + $0x8] sm:$0xff]
    %432 = vset.pattern.permute.xlu0 0
    %433 = vperm.xlu0 %432, %v429
    %v434 = vpop.permute.xlu0 %433
    %437 = vset.pattern.permute.xlu0 0
    %438 = vperm.xlu0 %437, %v430
    %v439 = vpop.permute.xlu0 %438
    %vm441 = vcmask 130048
    %v443 = vsel %vm441, %v427, 0
    %v446 = vsel %vm441, %v428, 0
    %448 = vmatprep.subr.mxu0 0.0
    %449 = vmatpush1.msra.mxu0 %v425
    %450 = vmatprep.subr.mxu0 0.0
    %451 = vmatpush1.msra.mxu0 %v426
    %452 = vmatprep.subr.mxu0 0.0
    %453 = vmatpush1.msra.mxu0 0.0
    %454 = vmatprep.subr.mxu0 0.0
    %455 = vmatpush1.msra.mxu0 0.0
    %456 = vmatprep.subr.mxu0 0.0
    %457 = vmatpush1.msra.mxu0 0.0
    %458 = vmatprep.subr.mxu0 0.0
    %459 = vmatpush1.msra.mxu0 0.0
    %460 = vmatprep.subr.mxu0 0.0
    %461 = vmatpush1.msra.mxu0 0.0
    %462 = vmatprep.subr.mxu0 0.0
    %463 = vmatpush1.msra.mxu0 0.0
    %464 = vmatprep.subr.mxu0 0.0
    %465 = vmatpush1.msra.mxu0 0.0
    %466 = vmatprep.subr.mxu0 0.0
    %467 = vmatpush1.msra.mxu0 0.0
    %468 = vmatprep.subr.mxu0 0.0
    %469 = vmatpush1.msra.mxu0 0.0
    %470 = vmatprep.subr.mxu0 0.0
    %471 = vmatpush1.msra.mxu0 0.0
    %472 = vmatprep.subr.mxu0 0.0
    %473 = vmatpush1.msra.mxu0 0.0
    %474 = vmatprep.subr.mxu0 0.0
    %475 = vmatpush1.msra.mxu0 0.0
    %476 = vmatprep.subr.mxu0 0.0
    %477 = vmatpush1.msra.mxu0 0.0
    %478 = vmatprep.subr.mxu0 0.0
    %479 = vmatpush1.msra.mxu0 0.0
    %480 = vmatprep.subr.mxu0 0.0
    %481 = vmatpush1.msra.mxu0 0.0
    %482 = vmatprep.subr.mxu0 0.0
    %483 = vmatpush1.msra.mxu0 0.0
    %484 = vmatprep.subr.mxu0 0.0
    %485 = vmatpush1.msra.mxu0 0.0
    %486 = vmatprep.subr.mxu0 0.0
    %487 = vmatpush1.msra.mxu0 0.0
    %488 = vmatprep.subr.mxu0 0.0
    %489 = vmatpush1.msra.mxu0 0.0
    %490 = vmatprep.subr.mxu0 0.0
    %491 = vmatpush1.msra.mxu0 0.0
    %492 = vmatprep.subr.mxu0 0.0
    %493 = vmatpush1.msra.mxu0 0.0
    %494 = vmatprep.subr.mxu0 0.0
    %495 = vmatpush1.msra.mxu0 0.0
    %496 = vmatprep.subr.mxu0 0.0
    %497 = vmatpush1.msra.mxu0 0.0
    %498 = vmatprep.subr.mxu0 0.0
    %499 = vmatpush1.msra.mxu0 0.0
    %500 = vmatprep.subr.mxu0 0.0
    %501 = vmatpush1.msra.mxu0 0.0
    %502 = vmatprep.subr.mxu0 0.0
    %503 = vmatpush1.msra.mxu0 0.0
    %504 = vmatprep.subr.mxu0 0.0
    %505 = vmatpush1.msra.mxu0 0.0
    %506 = vmatprep.subr.mxu0 0.0
    %507 = vmatpush1.msra.mxu0 0.0
    %508 = vmatprep.subr.mxu0 0.0
    %509 = vmatpush1.msra.mxu0 0.0
    %510 = vmatprep.subr.mxu0 0.0
    %511 = vmatpush1.msra.mxu0 0.0
    %512 = vmatprep.mubr.f32.mxu0 0.0
    %513 = vmatmul.mubr.f32.gmra.mrb[0].mxu0 %v443
    %v514 = vpop.f32.mrb[0].mxu0
    %v515 = vadd.f32 %v434, %v514
    %v516 = vpop.f32.mrb[0].mxu0
    %517 = vmatprep.mubr.f32.mxu0 0.0
    %518 = vmatmul.mubr.f32.gmra.mrb[0].mxu0 %v446
    %v519 = vpop.f32.mrb[0].mxu0
    %v520 = vadd.f32 %v439, %v519
    %v521 = vpop.f32.mrb[0].mxu0
    %522 = vdwg.mxu0
    %v523 = vmul.f32 %v515, 0.01
    %v524 = vmul.f32 %v520, 0.01
    %v525 = vmax.f32 %v515, %v523
    %v526 = vmax.f32 %v520, %v524
    %v527 = vld [vmem:[%s10] sm:$0x1]
    %v528 = vld [vmem:[#allocation2] sm:$0x1]
    %530 = vset.pattern.permute.xlu0 0
    %531 = vperm.xlu0 %530, %v528
    %v532 = vpop.permute.xlu0 %531
    %v534 = vlaneseq
    %v535 = vshrl.u32 %v534, 7
    %v536 = vsub.s32 0, %v535
    %v537 = vrot.slane %v532, %v536
    %v539 = vsel %vm441, %v527, 0
    %541 = vmatprep.subr.mxu0 0.0
    %542 = vmatpush1.msra.mxu0 %v525
    %543 = vmatprep.subr.mxu0 0.0
    %544 = vmatpush1.msra.mxu0 %v526
    %545 = vmatprep.subr.mxu0 0.0
    %546 = vmatpush1.msra.mxu0 0.0
    %547 = vmatprep.subr.mxu0 0.0
    %548 = vmatpush1.msra.mxu0 0.0
    %549 = vmatprep.subr.mxu0 0.0
    %550 = vmatpush1.msra.mxu0 0.0
    %551 = vmatprep.subr.mxu0 0.0
    %552 = vmatpush1.msra.mxu0 0.0
    %553 = vmatprep.subr.mxu0 0.0
    %554 = vmatpush1.msra.mxu0 0.0
    %555 = vmatprep.subr.mxu0 0.0
    %556 = vmatpush1.msra.mxu0 0.0
    %557 = vmatprep.subr.mxu0 0.0
    %558 = vmatpush1.msra.mxu0 0.0
    %559 = vmatprep.subr.mxu0 0.0
    %560 = vmatpush1.msra.mxu0 0.0
    %561 = vmatprep.subr.mxu0 0.0
    %562 = vmatpush1.msra.mxu0 0.0
    %563 = vmatprep.subr.mxu0 0.0
    %564 = vmatpush1.msra.mxu0 0.0
    %565 = vmatprep.subr.mxu0 0.0
    %566 = vmatpush1.msra.mxu0 0.0
    %567 = vmatprep.subr.mxu0 0.0
    %568 = vmatpush1.msra.mxu0 0.0
    %569 = vmatprep.subr.mxu0 0.0
    %570 = vmatpush1.msra.mxu0 0.0
    %571 = vmatprep.subr.mxu0 0.0
    %572 = vmatpush1.msra.mxu0 0.0
    %573 = vmatprep.subr.mxu0 0.0
    %574 = vmatpush1.msra.mxu0 0.0
    %575 = vmatprep.subr.mxu0 0.0
    %576 = vmatpush1.msra.mxu0 0.0
    %577 = vmatprep.subr.mxu0 0.0
    %578 = vmatpush1.msra.mxu0 0.0
    %579 = vmatprep.subr.mxu0 0.0
    %580 = vmatpush1.msra.mxu0 0.0
    %581 = vmatprep.subr.mxu0 0.0
    %582 = vmatpush1.msra.mxu0 0.0
    %583 = vmatprep.subr.mxu0 0.0
    %584 = vmatpush1.msra.mxu0 0.0
    %585 = vmatprep.subr.mxu0 0.0
    %586 = vmatpush1.msra.mxu0 0.0
    %587 = vmatprep.subr.mxu0 0.0
    %588 = vmatpush1.msra.mxu0 0.0
    %589 = vmatprep.subr.mxu0 0.0
    %590 = vmatpush1.msra.mxu0 0.0
    %591 = vmatprep.subr.mxu0 0.0
    %592 = vmatpush1.msra.mxu0 0.0
    %593 = vmatprep.subr.mxu0 0.0
    %594 = vmatpush1.msra.mxu0 0.0
    %595 = vmatprep.subr.mxu0 0.0
    %596 = vmatpush1.msra.mxu0 0.0
    %597 = vmatprep.subr.mxu0 0.0
    %598 = vmatpush1.msra.mxu0 0.0
    %599 = vmatprep.subr.mxu0 0.0
    %600 = vmatpush1.msra.mxu0 0.0
    %601 = vmatprep.subr.mxu0 0.0
    %602 = vmatpush1.msra.mxu0 0.0
    %603 = vmatprep.subr.mxu0 0.0
    %604 = vmatpush1.msra.mxu0 0.0
    %605 = vmatprep.mubr.f32.mxu0 0.0
    %606 = vmatmul.mubr.f32.gmra.mrb[0].mxu0 %v539
    %v607 = vpop.f32.mrb[0].mxu0
    %v608 = vadd.f32 %v537, %v607
    %v609 = vpop.f32.mrb[0].mxu0
    %610 = vdwg.mxu0
    %v611 = vxor.u32 %v608, 2147483648
    %v612 = vmul.f32 %v611, 1.442695
    %v613 = vpow.pop %v612
    %v614 = vadd.f32 %v613, 1.0
    %v615 = vrcp.pop %v614
    %v616 = vmul.f32 1.0, %v615
    %vm617 = vcmask 8192
    %618 = vst.msk [vmem:[#allocation3] sm:$0x1] %vm617, %v616
    // Predicated region
    $region50: #{tpu_custom_call.1} parent=1 // pred_check
      _
    $region51: #{tpu_custom_call.1} parent=1 // pred_check_branch
      %620 = sbr.rel (0) target = $region53
    $region52: #{tpu_custom_call.1} parent=1 // pred_region
      %s622 = ssub.s32 16, 16
      %623 = vsyncadd [#allocation4], %s622
      %s625 = sshll.u32 [#allocation3], 4
      %s626 = int_to_ptr.vmem [resolvable:$true] %s625
      %628 = dma.vmem_to_hbm [thread:$0]  %s626, 16, %s12, [#allocation4]
    $region53: #{tpu_custom_call.1} parent=1 // pred_fallthru
      _
    // Predicated region
    $region54: #{tpu_custom_call.1} parent=1 // pred_check
      _
    $region55: #{tpu_custom_call.1} parent=1 // pred_check_branch
      %630 = sbr.rel (0) target = $region57
    $region56: #{tpu_custom_call.1} parent=1 // pred_region
      %631 = dma.done [#allocation4], 16
    $region57: #{tpu_custom_call.1} parent=1 // pred_fallthru
      _
    %632 = vsyncpa [#allocation4], 1

</llo_original>
